<compile_context>
chip_gen: v6e
topology: v6e:2x2x1
jax: 0.10.0
libtpu: 0.0.40
codegen_flags: <defaults>
</compile_context>

<pallas_src>
import numpy as np
import jax
import jax.numpy as jnp
from jax.experimental import pallas as pl
from jax.experimental.pallas import tpu as pltpu  # noqa: F401  (kept for TPU params if needed)

# -----------------------------------------------------------------------------
# Config consistent with AnchorOccHead (scene_size / bev dims chosen so that
# get_ref_3d()'s vol_dim == (bev_h, bev_w, bev_z), as in SemanticKITTI).
# -----------------------------------------------------------------------------
BEV_H, BEV_W, BEV_Z = 8, 8, 4
EMBED_DIMS = 32
SCENE_SIZE = (51.2, 51.2, 25.6)
PC_RANGE = (0.0, -25.6, -2.0, 51.2, 25.6, 23.6)
N_VOX = BEV_H * BEV_W * BEV_Z      # 256


def get_ref_3d():
    """NumPy replica of AnchorOccHead.get_ref_3d (static host-side table)."""
    vox_origin = np.array([PC_RANGE[:3]])
    voxel_size = SCENE_SIZE[0] / BEV_H            # real_h / bev_h
    vol_bnds = np.zeros((3, 2))
    vol_bnds[:, 0] = vox_origin
    vol_bnds[:, 1] = vox_origin + np.array(SCENE_SIZE)
    vol_dim = np.ceil((vol_bnds[:, 1] - vol_bnds[:, 0]) / voxel_size).copy(order='C').astype(int)
    idx = np.array([range(vol_dim[0] * vol_dim[1] * vol_dim[2])])
    xv, yv, zv = np.meshgrid(range(vol_dim[0]), range(vol_dim[1]), range(vol_dim[2]),
                             indexing='ij')
    vox_coords = np.concatenate([yv.reshape(1, -1), xv.reshape(1, -1), zv.reshape(1, -1), idx],
                                axis=0).astype(int).T
    ref_3d = np.concatenate([(yv.reshape(1, -1) + 0.5) / BEV_W,
                             (xv.reshape(1, -1) + 0.5) / BEV_H,
                             (zv.reshape(1, -1) + 0.5) / BEV_Z], axis=0).astype(np.float64).T
    return vox_coords, ref_3d


# -----------------------------------------------------------------------------
# Single fused kernel — all live data is ~70 KB, so everything fits in one VMEM
# block with no grid at all:
#   queries  = embed + voxel_feat[0]                           (C, N)
#   refined  = W^T @ queries + b     ("transformer" stand-in, see TODO)
#   out[3:]  = where(anchor > 0, refined, voxel_feat[0])       (C, N)
#   out[0:3] = ref_3d * scale + offset                         (3, N)
# All constants (scale/offset) are passed as inputs -> no captured consts.
# -----------------------------------------------------------------------------
def _fused_head_kernel(anchor_ref, ref3d_ref, scale_ref, offset_ref,
                       embed_ref, feat_ref, w_ref, b_ref, out_ref):
    feat = feat_ref[...]                                    # (C, N)
    queries = feat + embed_ref[...]                         # (C, N)
    # TODO(synk): the real module calls self.transformer.refine_vox_feat (a
    # config-built deformable cross-attention over mlvl_feats); it is replaced
    # here by a deterministic per-voxel linear projection on the MXU.
    refined = (jnp.dot(w_ref[...], queries, preferred_element_type=jnp.float32)
               + b_ref[...]).astype(feat.dtype)             # (C, N)
    mask = anchor_ref[...] > 0                              # (1, N) -> broadcast over C
    # Scatter-free equivalent of voxel_feat[unmasked_idx] = seed_feats.
    out_ref[3:, :] = jnp.where(mask, refined, feat)
    # ref_3d scaled into pc_range, written to its own sublane slab (no concat).
    out_ref[0:3, :] = ref3d_ref[...] * scale_ref[...] + offset_ref[...]


def fused_head(anchor, ref3d, scale, offset, embed_t, feat_t, w_t, b_t):
    C, N = feat_t.shape
    # No grid: a single invocation with full arrays resident in VMEM.
    return pl.pallas_call(
        _fused_head_kernel,
        out_shape=jax.ShapeDtypeStruct((3 + C, N), feat_t.dtype),
    )(anchor, ref3d, scale, offset, embed_t, feat_t, w_t, b_t)


# -----------------------------------------------------------------------------
# Forward (mirrors AnchorOccHead.forward).  Fully jittable: no host np.where,
# no data-dependent shapes, no gather/scatter.
# -----------------------------------------------------------------------------
def anchor_occ_head_forward(mlvl_feats, voxel_feat, voxel_anchor, params):
    dtype = mlvl_feats[0].dtype
    C, N = EMBED_DIMS, N_VOX

    # Static host-side reference table (trace-time constant, like torch's numpy).
    _, ref_3d = get_ref_3d()
    ref3d_t = jnp.asarray(ref_3d.T, dtype=dtype)                     # (3, N), normalized

    scale = jnp.asarray([[PC_RANGE[3] - PC_RANGE[0]],
                         [PC_RANGE[4] - PC_RANGE[1]],
                         [PC_RANGE[5] - PC_RANGE[2]]], dtype=dtype)  # (3, 1)
    offset = jnp.asarray([[PC_RANGE[0]], [PC_RANGE[1]], [PC_RANGE[2]]], dtype=dtype)

    # Anchor mask for batch 0, flattened in the same (H, W, Z) C-order as feats.
    anchor_flat = voxel_anchor[0].reshape(1, N).astype(dtype)        # (1, N)

    # voxel_feat batch 0 in its native flattened (C, N) layout (no transpose).
    # TODO(synk): like the reference, only batch 0 of voxel_feat is consumed.
    feat_t = voxel_feat[0].reshape(C, N).astype(dtype)               # (C, N)

    embed_t = params['embed'].astype(dtype).T                        # (C, N)
    w_t = params['w'].astype(dtype).T                                # (C, C)
    b_t = params['b'].astype(dtype).reshape(C, 1)                    # (C, 1)

    out = fused_head(anchor_flat, ref3d_t, scale, offset, embed_t, feat_t, w_t, b_t)
    return out[None]                                                 # (1, 3 + C, N)


if __name__ == "__main__":
    key = jax.random.PRNGKey(0)
    k1, k2, k3, k4, k5, k6 = jax.random.split(key, 6)
    bs, num_cam = 2, 2
    dtype = jnp.float32

    mlvl_feats = (jax.random.normal(k1, (bs, num_cam, EMBED_DIMS, 16, 16), dtype),)
    voxel_feat = jax.random.normal(k2, (bs, EMBED_DIMS, BEV_H, BEV_W, BEV_Z), dtype)
    voxel_anchor = (jax.random.uniform(k3, (bs, BEV_H, BEV_W, BEV_Z)) > 0.5).astype(dtype)

    params = {
        'embed': jax.random.normal(k4, (N_VOX, EMBED_DIMS), jnp.float32) * 0.02,
        'w': jax.random.normal(k5, (EMBED_DIMS, EMBED_DIMS), jnp.float32) * 0.05,
        'b': jax.random.normal(k6, (EMBED_DIMS,), jnp.float32) * 0.01,
    }

    fwd = jax.jit(anchor_occ_head_forward)
    out = jax.block_until_ready(fwd(mlvl_feats, voxel_feat, voxel_anchor, params))
    assert out.shape == (1, 3 + EMBED_DIMS, N_VOX), out.shape
    assert out.dtype == dtype
    print("KERNEL_OK")
</pallas_src>

<mosaic_0001>
module attributes {stable_mosaic.version = 11 : i64} {
  func.func @_fused_head_kernel(%arg0: memref<1x256xf32, #tpu.memory_space<vmem>>, %arg1: memref<3x256xf32, #tpu.memory_space<vmem>>, %arg2: memref<3x1xf32, #tpu.memory_space<vmem>>, %arg3: memref<3x1xf32, #tpu.memory_space<vmem>>, %arg4: memref<32x256xf32, #tpu.memory_space<vmem>>, %arg5: memref<32x256xf32, #tpu.memory_space<vmem>>, %arg6: memref<32x32xf32, #tpu.memory_space<vmem>>, %arg7: memref<32x1xf32, #tpu.memory_space<vmem>>, %arg8: memref<35x256xf32, #tpu.memory_space<vmem>>) attributes {dimension_semantics = [], scalar_prefetch = 0 : i64, scratch_operands = 0 : i64, tpu.core_type = #tpu.core_type<tc>} {
    %c0 = arith.constant 0 : index
    %c0_0 = arith.constant 0 : index
    %0 = vector.load %arg5[%c0, %c0_0] : memref<32x256xf32, #tpu.memory_space<vmem>>, vector<32x256xf32>
    %c0_1 = arith.constant 0 : index
    %c0_2 = arith.constant 0 : index
    %1 = vector.load %arg4[%c0_1, %c0_2] : memref<32x256xf32, #tpu.memory_space<vmem>>, vector<32x256xf32>
    %2 = arith.addf %0, %1 : vector<32x256xf32>
    %c0_3 = arith.constant 0 : index
    %c0_4 = arith.constant 0 : index
    %3 = vector.load %arg6[%c0_3, %c0_4] : memref<32x32xf32, #tpu.memory_space<vmem>>, vector<32x32xf32>
    %cst = arith.constant dense<0.000000e+00> : vector<32x256xf32>
    %4 = tpu.matmul %3, %2, %cst {dimension_numbers = #tpu.dot_dimension_numbers<[1], [0], [0], [1], [0, 0, 1, 1], [], []>} : vector<32x32xf32>, vector<32x256xf32>, vector<32x256xf32> -> vector<32x256xf32>
    %c0_5 = arith.constant 0 : index
    %c0_6 = arith.constant 0 : index
    %5 = vector.load %arg7[%c0_5, %c0_6] : memref<32x1xf32, #tpu.memory_space<vmem>>, vector<32x1xf32>
    %6 = vector.broadcast %5 : vector<32x1xf32> to vector<32x256xf32>
    %7 = arith.addf %4, %6 : vector<32x256xf32>
    %c0_7 = arith.constant 0 : index
    %c0_8 = arith.constant 0 : index
    %8 = vector.load %arg0[%c0_7, %c0_8] : memref<1x256xf32, #tpu.memory_space<vmem>>, vector<1x256xf32>
    %cst_9 = arith.constant 0.000000e+00 : f32
    %9 = vector.broadcast %cst_9 : f32 to vector<1x256xf32>
    %10 = arith.cmpf ogt, %8, %9 : vector<1x256xf32>
    %11 = vector.shape_cast %10 : vector<1x256xi1> to vector<1x256xi1>
    %12 = vector.broadcast %11 : vector<1x256xi1> to vector<32x256xi1>
    %13 = arith.select %12, %7, %0 : vector<32x256xi1>, vector<32x256xf32>
    %c3 = arith.constant 3 : index
    %c0_10 = arith.constant 0 : index
    %14 = vector.load %arg8[%c3, %c0_10] : memref<35x256xf32, #tpu.memory_space<vmem>>, vector<32x256xf32>
    tpu.vector_store %arg8[%c3, %c0_10], %13 {strides = array<i32>} : memref<35x256xf32, #tpu.memory_space<vmem>>, vector<32x256xf32>,
    %c0_11 = arith.constant 0 : index
    %c0_12 = arith.constant 0 : index
    %15 = vector.load %arg1[%c0_11, %c0_12] : memref<3x256xf32, #tpu.memory_space<vmem>>, vector<3x256xf32>
    %c0_13 = arith.constant 0 : index
    %c0_14 = arith.constant 0 : index
    %16 = vector.load %arg2[%c0_13, %c0_14] : memref<3x1xf32, #tpu.memory_space<vmem>>, vector<3x1xf32>
    %17 = vector.broadcast %16 : vector<3x1xf32> to vector<3x256xf32>
    %18 = arith.mulf %15, %17 : vector<3x256xf32>
    %c0_15 = arith.constant 0 : index
    %c0_16 = arith.constant 0 : index
    %19 = vector.load %arg3[%c0_15, %c0_16] : memref<3x1xf32, #tpu.memory_space<vmem>>, vector<3x1xf32>
    %20 = vector.broadcast %19 : vector<3x1xf32> to vector<3x256xf32>
    %21 = arith.addf %18, %20 : vector<3x256xf32>
    %c0_17 = arith.constant 0 : index
    %c0_18 = arith.constant 0 : index
    %22 = vector.load %arg8[%c0_17, %c0_18] : memref<35x256xf32, #tpu.memory_space<vmem>>, vector<3x256xf32>
    tpu.vector_store %arg8[%c0_17, %c0_18], %21 {strides = array<i32>} : memref<35x256xf32, #tpu.memory_space<vmem>>, vector<3x256xf32>,
    return
  }
}

</mosaic_0001>

<llo_original>
// kernel: squeeze.2
$region0: #{squeeze.2}
  %s0 = inlined_call_operand.vmem [shape: f32[1,8,8,4], index: 0, kind: input, shape index: {}]
  %s1 = inlined_call_operand.vmem [shape: f32[1,256], index: 1, kind: output, shape index: {}]
  $region1: #{squeeze.2} parent=0
    #allocation0 [shape = 'u8[8192]{0}', space=vmem, size = 0x2000, scoped, tag = 'scoped mem for output reshape']
    %v2 = vld [vmem:[%s0] sm:$0x1]
    %s3 = scalar_lea.vmem %s0, 31
    %v4 = vld [vmem:[%s3] sm:$0x2]
    %vm5 = vcmask 1041409
    %v6 = vsel %vm5, %v4, %v2
    %vm7 = vcmask 31744
    %8 = vst.msk [vmem:[#allocation0] ss:$8 sm:$0x3] %vm7, %v6
    %s9 = scalar_lea.vmem %s0, 31
    %v10 = vld [vmem:[%s9] sm:$0x1]
    %s11 = scalar_lea.vmem %s0, 62
    %v12 = vld [vmem:[%s11] sm:$0x2]
    %vm13 = vcmask 1041409
    %v14 = vsel %vm13, %v12, %v10
    %15 = vrot.lane.b32.xlu0 %v14, 124
    %v16 = vpop.permute.xlu0 %15
    %vm17 = vcmask 1048544
    %18 = vst.msk [vmem:[#allocation0] ss:$8 sm:$0x3] %vm17, %v16
    %s19 = scalar_lea.vmem %s0, 30
    %v20 = vld [vmem:[%s19] sm:$0x1]
    %s21 = scalar_lea.vmem %s0, 61
    %v22 = vld [vmem:[%s21] sm:$0x2]
    %vm23 = vcmask 1041409
    %v24 = vsel %vm23, %v22, %v20
    %25 = vrot.lane.b32.xlu0 %v24, 120
    %v26 = vpop.permute.xlu0 %25
    %vm27 = vcmask 1015744
    %28 = vst.msk [vmem:[#allocation0] ss:$8 sm:$0x3] %vm27, %v26
    %s29 = scalar_lea.vmem %s0, 29
    %v30 = vld [vmem:[%s29] sm:$0x1]
    %s31 = scalar_lea.vmem %s0, 60
    %v32 = vld [vmem:[%s31] sm:$0x2]
    %vm33 = vcmask 1041409
    %v34 = vsel %vm33, %v32, %v30
    %35 = vrot.lane.b32.xlu0 %v34, 116
    %v36 = vpop.permute.xlu0 %35
    %vm37 = vcmask 982944
    %38 = vst.msk [vmem:[#allocation0] ss:$8 sm:$0x3] %vm37, %v36
    %s39 = scalar_lea.vmem %s0, 28
    %v40 = vld [vmem:[%s39] sm:$0x1]
    %s41 = scalar_lea.vmem %s0, 59
    %v42 = vld [vmem:[%s41] sm:$0x2]
    %vm43 = vcmask 1041409
    %v44 = vsel %vm43, %v42, %v40
    %45 = vrot.lane.b32.xlu0 %v44, 112
    %v46 = vpop.permute.xlu0 %45
    %vm47 = vcmask 950144
    %48 = vst.msk [vmem:[#allocation0] ss:$8 sm:$0x3] %vm47, %v46
    %s49 = scalar_lea.vmem %s0, 27
    %v50 = vld [vmem:[%s49] sm:$0x1]
    %s51 = scalar_lea.vmem %s0, 58
    %v52 = vld [vmem:[%s51] sm:$0x2]
    %vm53 = vcmask 1041409
    %v54 = vsel %vm53, %v52, %v50
    %55 = vrot.lane.b32.xlu0 %v54, 108
    %v56 = vpop.permute.xlu0 %55
    %vm57 = vcmask 917344
    %58 = vst.msk [vmem:[#allocation0] ss:$8 sm:$0x3] %vm57, %v56
    %s59 = scalar_lea.vmem %s0, 26
    %v60 = vld [vmem:[%s59] sm:$0x1]
    %s61 = scalar_lea.vmem %s0, 57
    %v62 = vld [vmem:[%s61] sm:$0x2]
    %vm63 = vcmask 1041409
    %v64 = vsel %vm63, %v62, %v60
    %65 = vrot.lane.b32.xlu0 %v64, 104
    %v66 = vpop.permute.xlu0 %65
    %vm67 = vcmask 884544
    %68 = vst.msk [vmem:[#allocation0] ss:$8 sm:$0x3] %vm67, %v66
    %s69 = scalar_lea.vmem %s0, 25
    %v70 = vld [vmem:[%s69] sm:$0x1]
    %s71 = scalar_lea.vmem %s0, 56
    %v72 = vld [vmem:[%s71] sm:$0x2]
    %vm73 = vcmask 1041409
    %v74 = vsel %vm73, %v72, %v70
    %75 = vrot.lane.b32.xlu0 %v74, 100
    %v76 = vpop.permute.xlu0 %75
    %vm77 = vcmask 851744
    %78 = vst.msk [vmem:[#allocation0] ss:$8 sm:$0x3] %vm77, %v76
    %s79 = scalar_lea.vmem %s0, 24
    %v80 = vld [vmem:[%s79] sm:$0x1]
    %s81 = scalar_lea.vmem %s0, 55
    %v82 = vld [vmem:[%s81] sm:$0x2]
    %vm83 = vcmask 1041409
    %v84 = vsel %vm83, %v82, %v80
    %85 = vrot.lane.b32.xlu0 %v84, 96
    %v86 = vpop.permute.xlu0 %85
    %vm87 = vcmask 818944
    %88 = vst.msk [vmem:[#allocation0] ss:$8 sm:$0x3] %vm87, %v86
    %s89 = scalar_lea.vmem %s0, 23
    %v90 = vld [vmem:[%s89] sm:$0x1]
    %s91 = scalar_lea.vmem %s0, 54
    %v92 = vld [vmem:[%s91] sm:$0x2]
    %vm93 = vcmask 1041409
    %v94 = vsel %vm93, %v92, %v90
    %95 = vrot.lane.b32.xlu0 %v94, 92
    %v96 = vpop.permute.xlu0 %95
    %vm97 = vcmask 786144
    %98 = vst.msk [vmem:[#allocation0] ss:$8 sm:$0x3] %vm97, %v96
    %s99 = scalar_lea.vmem %s0, 22
    %v100 = vld [vmem:[%s99] sm:$0x1]
    %s101 = scalar_lea.vmem %s0, 53
    %v102 = vld [vmem:[%s101] sm:$0x2]
    %vm103 = vcmask 1041409
    %v104 = vsel %vm103, %v102, %v100
    %105 = vrot.lane.b32.xlu0 %v104, 88
    %v106 = vpop.permute.xlu0 %105
    %vm107 = vcmask 753344
    %108 = vst.msk [vmem:[#allocation0] ss:$8 sm:$0x3] %vm107, %v106
    %s109 = scalar_lea.vmem %s0, 21
    %v110 = vld [vmem:[%s109] sm:$0x1]
    %s111 = scalar_lea.vmem %s0, 52
    %v112 = vld [vmem:[%s111] sm:$0x2]
    %vm113 = vcmask 1041409
    %v114 = vsel %vm113, %v112, %v110
    %115 = vrot.lane.b32.xlu0 %v114, 84
    %v116 = vpop.permute.xlu0 %115
    %vm117 = vcmask 720544
    %118 = vst.msk [vmem:[#allocation0] ss:$8 sm:$0x3] %vm117, %v116
    %s119 = scalar_lea.vmem %s0, 20
    %v120 = vld [vmem:[%s119] sm:$0x1]
    %s121 = scalar_lea.vmem %s0, 51
    %v122 = vld [vmem:[%s121] sm:$0x2]
    %vm123 = vcmask 1041409
    %v124 = vsel %vm123, %v122, %v120
    %125 = vrot.lane.b32.xlu0 %v124, 80
    %v126 = vpop.permute.xlu0 %125
    %vm127 = vcmask 687744
    %128 = vst.msk [vmem:[#allocation0] ss:$8 sm:$0x3] %vm127, %v126
    %s129 = scalar_lea.vmem %s0, 19
    %v130 = vld [vmem:[%s129] sm:$0x1]
    %s131 = scalar_lea.vmem %s0, 50
    %v132 = vld [vmem:[%s131] sm:$0x2]
    %vm133 = vcmask 1041409
    %v134 = vsel %vm133, %v132, %v130
    %135 = vrot.lane.b32.xlu0 %v134, 76
    %v136 = vpop.permute.xlu0 %135
    %vm137 = vcmask 654944
    %138 = vst.msk [vmem:[#allocation0] ss:$8 sm:$0x3] %vm137, %v136
    %s139 = scalar_lea.vmem %s0, 18
    %v140 = vld [vmem:[%s139] sm:$0x1]
    %s141 = scalar_lea.vmem %s0, 49
    %v142 = vld [vmem:[%s141] sm:$0x2]
    %vm143 = vcmask 1041409
    %v144 = vsel %vm143, %v142, %v140
    %145 = vrot.lane.b32.xlu0 %v144, 72
    %v146 = vpop.permute.xlu0 %145
    %vm147 = vcmask 622144
    %148 = vst.msk [vmem:[#allocation0] ss:$8 sm:$0x3] %vm147, %v146
    %s149 = scalar_lea.vmem %s0, 17
    %v150 = vld [vmem:[%s149] sm:$0x1]
    %s151 = scalar_lea.vmem %s0, 48
    %v152 = vld [vmem:[%s151] sm:$0x2]
    %vm153 = vcmask 1041409
    %v154 = vsel %vm153, %v152, %v150
    %155 = vrot.lane.b32.xlu0 %v154, 68
    %v156 = vpop.permute.xlu0 %155
    %vm157 = vcmask 589344
    %158 = vst.msk [vmem:[#allocation0] ss:$8 sm:$0x3] %vm157, %v156
    %s159 = scalar_lea.vmem %s0, 16
    %v160 = vld [vmem:[%s159] sm:$0x1]
    %s161 = scalar_lea.vmem %s0, 47
    %v162 = vld [vmem:[%s161] sm:$0x2]
    %vm163 = vcmask 1041409
    %v164 = vsel %vm163, %v162, %v160
    %165 = vrot.lane.b32.xlu0 %v164, 64
    %v166 = vpop.permute.xlu0 %165
    %vm167 = vcmask 556544
    %168 = vst.msk [vmem:[#allocation0] ss:$8 sm:$0x3] %vm167, %v166
    %s169 = scalar_lea.vmem %s0, 15
    %v170 = vld [vmem:[%s169] sm:$0x1]
    %s171 = scalar_lea.vmem %s0, 46
    %v172 = vld [vmem:[%s171] sm:$0x2]
    %vm173 = vcmask 1041409
    %v174 = vsel %vm173, %v172, %v170
    %175 = vrot.lane.b32.xlu0 %v174, 60
    %v176 = vpop.permute.xlu0 %175
    %vm177 = vcmask 523744
    %178 = vst.msk [vmem:[#allocation0] ss:$8 sm:$0x3] %vm177, %v176
    %s179 = scalar_lea.vmem %s0, 14
    %v180 = vld [vmem:[%s179] sm:$0x1]
    %s181 = scalar_lea.vmem %s0, 45
    %v182 = vld [vmem:[%s181] sm:$0x2]
    %vm183 = vcmask 1041409
    %v184 = vsel %vm183, %v182, %v180
    %185 = vrot.lane.b32.xlu0 %v184, 56
    %v186 = vpop.permute.xlu0 %185
    %vm187 = vcmask 490944
    %188 = vst.msk [vmem:[#allocation0] ss:$8 sm:$0x3] %vm187, %v186
    %s189 = scalar_lea.vmem %s0, 13
    %v190 = vld [vmem:[%s189] sm:$0x1]
    %s191 = scalar_lea.vmem %s0, 44
    %v192 = vld [vmem:[%s191] sm:$0x2]
    %vm193 = vcmask 1041409
    %v194 = vsel %vm193, %v192, %v190
    %195 = vrot.lane.b32.xlu0 %v194, 52
    %v196 = vpop.permute.xlu0 %195
    %vm197 = vcmask 458144
    %198 = vst.msk [vmem:[#allocation0] ss:$8 sm:$0x3] %vm197, %v196
    %s199 = scalar_lea.vmem %s0, 12
    %v200 = vld [vmem:[%s199] sm:$0x1]
    %s201 = scalar_lea.vmem %s0, 43
    %v202 = vld [vmem:[%s201] sm:$0x2]
    %vm203 = vcmask 1041409
    %v204 = vsel %vm203, %v202, %v200
    %205 = vrot.lane.b32.xlu0 %v204, 48
    %v206 = vpop.permute.xlu0 %205
    %vm207 = vcmask 425344
    %208 = vst.msk [vmem:[#allocation0] ss:$8 sm:$0x3] %vm207, %v206
    %s209 = scalar_lea.vmem %s0, 11
    %v210 = vld [vmem:[%s209] sm:$0x1]
    %s211 = scalar_lea.vmem %s0, 42
    %v212 = vld [vmem:[%s211] sm:$0x2]
    %vm213 = vcmask 1041409
    %v214 = vsel %vm213, %v212, %v210
    %215 = vrot.lane.b32.xlu0 %v214, 44
    %v216 = vpop.permute.xlu0 %215
    %vm217 = vcmask 392544
    %218 = vst.msk [vmem:[#allocation0] ss:$8 sm:$0x3] %vm217, %v216
    %s219 = scalar_lea.vmem %s0, 10
    %v220 = vld [vmem:[%s219] sm:$0x1]
    %s221 = scalar_lea.vmem %s0, 41
    %v222 = vld [vmem:[%s221] sm:$0x2]
    %vm223 = vcmask 1041409
    %v224 = vsel %vm223, %v222, %v220
    %225 = vrot.lane.b32.xlu0 %v224, 40
    %v226 = vpop.permute.xlu0 %225
    %vm227 = vcmask 359744
    %228 = vst.msk [vmem:[#allocation0] ss:$8 sm:$0x3] %vm227, %v226
    %s229 = scalar_lea.vmem %s0, 9
    %v230 = vld [vmem:[%s229] sm:$0x1]
    %s231 = scalar_lea.vmem %s0, 40
    %v232 = vld [vmem:[%s231] sm:$0x2]
    %vm233 = vcmask 1041409
    %v234 = vsel %vm233, %v232, %v230
    %235 = vrot.lane.b32.xlu0 %v234, 36
    %v236 = vpop.permute.xlu0 %235
    %vm237 = vcmask 326944
    %238 = vst.msk [vmem:[#allocation0] ss:$8 sm:$0x3] %vm237, %v236
    %s239 = scalar_lea.vmem %s0, 8
    %v240 = vld [vmem:[%s239] sm:$0x1]
    %s241 = scalar_lea.vmem %s0, 39
    %v242 = vld [vmem:[%s241] sm:$0x2]
    %vm243 = vcmask 1041409
    %v244 = vsel %vm243, %v242, %v240
    %245 = vrot.lane.b32.xlu0 %v244, 32
    %v246 = vpop.permute.xlu0 %245
    %vm247 = vcmask 294144
    %248 = vst.msk [vmem:[#allocation0] ss:$8 sm:$0x3] %vm247, %v246
    %s249 = scalar_lea.vmem %s0, 7
    %v250 = vld [vmem:[%s249] sm:$0x1]
    %s251 = scalar_lea.vmem %s0, 38
    %v252 = vld [vmem:[%s251] sm:$0x2]
    %vm253 = vcmask 1041409
    %v254 = vsel %vm253, %v252, %v250
    %255 = vrot.lane.b32.xlu0 %v254, 28
    %v256 = vpop.permute.xlu0 %255
    %vm257 = vcmask 261344
    %258 = vst.msk [vmem:[#allocation0] ss:$8 sm:$0x3] %vm257, %v256
    %s259 = scalar_lea.vmem %s0, 6
    %v260 = vld [vmem:[%s259] sm:$0x1]
    %s261 = scalar_lea.vmem %s0, 37
    %v262 = vld [vmem:[%s261] sm:$0x2]
    %vm263 = vcmask 1041409
    %v264 = vsel %vm263, %v262, %v260
    %265 = vrot.lane.b32.xlu0 %v264, 24
    %v266 = vpop.permute.xlu0 %265
    %vm267 = vcmask 228544
    %268 = vst.msk [vmem:[#allocation0] ss:$8 sm:$0x3] %vm267, %v266
    %s269 = scalar_lea.vmem %s0, 5
    %v270 = vld [vmem:[%s269] sm:$0x1]
    %s271 = scalar_lea.vmem %s0, 36
    %v272 = vld [vmem:[%s271] sm:$0x2]
    %vm273 = vcmask 1041409
    %v274 = vsel %vm273, %v272, %v270
    %275 = vrot.lane.b32.xlu0 %v274, 20
    %v276 = vpop.permute.xlu0 %275
    %vm277 = vcmask 195744
    %278 = vst.msk [vmem:[#allocation0] ss:$8 sm:$0x3] %vm277, %v276
    %s279 = scalar_lea.vmem %s0, 4
    %v280 = vld [vmem:[%s279] sm:$0x1]
    %s281 = scalar_lea.vmem %s0, 35
    %v282 = vld [vmem:[%s281] sm:$0x2]
    %vm283 = vcmask 1041409
    %v284 = vsel %vm283, %v282, %v280
    %285 = vrot.lane.b32.xlu0 %v284, 16
    %v286 = vpop.permute.xlu0 %285
    %vm287 = vcmask 162944
    %288 = vst.msk [vmem:[#allocation0] ss:$8 sm:$0x3] %vm287, %v286
    %s289 = scalar_lea.vmem %s0, 3
    %v290 = vld [vmem:[%s289] sm:$0x1]
    %s291 = scalar_lea.vmem %s0, 34
    %v292 = vld [vmem:[%s291] sm:$0x2]
    %vm293 = vcmask 1041409
    %v294 = vsel %vm293, %v292, %v290
    %295 = vrot.lane.b32.xlu0 %v294, 12
    %v296 = vpop.permute.xlu0 %295
    %vm297 = vcmask 130144
    %298 = vst.msk [vmem:[#allocation0] ss:$8 sm:$0x3] %vm297, %v296
    %s299 = scalar_lea.vmem %s0, 2
    %v300 = vld [vmem:[%s299] sm:$0x1]
    %s301 = scalar_lea.vmem %s0, 33
    %v302 = vld [vmem:[%s301] sm:$0x2]
    %vm303 = vcmask 1041409
    %v304 = vsel %vm303, %v302, %v300
    %305 = vrot.lane.b32.xlu0 %v304, 8
    %v306 = vpop.permute.xlu0 %305
    %vm307 = vcmask 97344
    %308 = vst.msk [vmem:[#allocation0] ss:$8 sm:$0x3] %vm307, %v306
    %s309 = scalar_lea.vmem %s0, 1
    %v310 = vld [vmem:[%s309] sm:$0x1]
    %s311 = scalar_lea.vmem %s0, 32
    %v312 = vld [vmem:[%s311] sm:$0x2]
    %vm313 = vcmask 1041409
    %v314 = vsel %vm313, %v312, %v310
    %315 = vrot.lane.b32.xlu0 %v314, 4
    %v316 = vpop.permute.xlu0 %315
    %vm317 = vcmask 64544
    %318 = vst.msk [vmem:[#allocation0] ss:$8 sm:$0x3] %vm317, %v316
    %s320 = sshll.u32 1, 1
    %s321 = ssub.s32 %s320, 1
    %v323 = vld [vmem:[#allocation0] sm:%s321]
    %s324 = sshll.u32 1, 1
    %s325 = ssub.s32 %s324, 1
    %326 = vst [vmem:[%s1] sm:%s325] %v323
    %s327 = scalar_lea.vmem [#allocation0], 8
    %v328 = vld [vmem:[%s327] sm:%s321]
    %s329 = sshll.u32 1, 1
    %s330 = ssub.s32 %s329, 1
    %s331 = scalar_lea.vmem %s1, 1
    %332 = vst [vmem:[%s331] sm:%s330] %v328

// kernel: anchor_occ_head_forward.1
$region0: #{anchor_occ_head_forward.1}
  #allocation0 [shape = 'u32[]', space=smem, size = 0x4, offset = 0x4, fixed_abs, tag = 'smem constant byte address 0x4 - core index']
  #allocation1 [shape = 'u32[144,128]{1,0:T(1,128)}', space=vmem, size = 0x12000, scoped, tag = 'internal scratch']
  %s0 = inlined_call_operand.vmem [shape: f32[1,256], index: 0, kind: input, shape index: {}]
  %s1 = inlined_call_operand.vmem [shape: f32[3,256], index: 1, kind: input, shape index: {}]
  %s2 = inlined_call_operand.vmem [shape: f32[3,1], index: 2, kind: input, shape index: {}]
  %s3 = inlined_call_operand.vmem [shape: f32[3,1], index: 3, kind: input, shape index: {}]
  %s4 = inlined_call_operand.vmem [shape: f32[32,256], index: 4, kind: input, shape index: {}]
  %s5 = inlined_call_operand.vmem [shape: f32[32,256], index: 5, kind: input, shape index: {}]
  %s6 = inlined_call_operand.vmem [shape: f32[32,32], index: 6, kind: input, shape index: {}]
  %s7 = inlined_call_operand.vmem [shape: f32[32,1], index: 7, kind: input, shape index: {}]
  %s8 = inlined_call_operand.vmem [shape: f32[35,256], index: 8, kind: output, shape index: {}]
  %s9 = sld [smem:[#allocation0]]
  $region42: #{anchor_occ_head_forward.1} parent=0
    _
  %s11 = ssub.s32 1, %s9
  %s12 = scalar_select 0, %s11, %s9
  // Predicated region
  $region2: #{anchor_occ_head_forward.1} parent=0 // pred_check
    _
  $region3: #{anchor_occ_head_forward.1} parent=0 // pred_check_branch
    %14 = sbr.rel (0) target = $region5
  $region4: #{anchor_occ_head_forward.1} parent=0 // pred_region
    _
  $region5: #{anchor_occ_head_forward.1} parent=0 // pred_fallthru
    _
  // Predicated region
  $region6: #{anchor_occ_head_forward.1} parent=0 // pred_check
    _
  $region7: #{anchor_occ_head_forward.1} parent=0 // pred_check_branch
    %16 = sbr.rel (0) target = $region9
  $region8: #{anchor_occ_head_forward.1} parent=0 // pred_region
    _
  $region9: #{anchor_occ_head_forward.1} parent=0 // pred_fallthru
    _
  // Predicated region
  $region10: #{anchor_occ_head_forward.1} parent=0 // pred_check
    _
  $region11: #{anchor_occ_head_forward.1} parent=0 // pred_check_branch
    %18 = sbr.rel (0) target = $region13
  $region12: #{anchor_occ_head_forward.1} parent=0 // pred_region
    _
  $region13: #{anchor_occ_head_forward.1} parent=0 // pred_fallthru
    _
  // Predicated region
  $region14: #{anchor_occ_head_forward.1} parent=0 // pred_check
    _
  $region15: #{anchor_occ_head_forward.1} parent=0 // pred_check_branch
    %20 = sbr.rel (0) target = $region17
  $region16: #{anchor_occ_head_forward.1} parent=0 // pred_region
    _
  $region17: #{anchor_occ_head_forward.1} parent=0 // pred_fallthru
    _
  // Predicated region
  $region18: #{anchor_occ_head_forward.1} parent=0 // pred_check
    _
  $region19: #{anchor_occ_head_forward.1} parent=0 // pred_check_branch
    %22 = sbr.rel (0) target = $region21
  $region20: #{anchor_occ_head_forward.1} parent=0 // pred_region
    _
  $region21: #{anchor_occ_head_forward.1} parent=0 // pred_fallthru
    _
  // Predicated region
  $region22: #{anchor_occ_head_forward.1} parent=0 // pred_check
    _
  $region23: #{anchor_occ_head_forward.1} parent=0 // pred_check_branch
    %24 = sbr.rel (0) target = $region25
  $region24: #{anchor_occ_head_forward.1} parent=0 // pred_region
    _
  $region25: #{anchor_occ_head_forward.1} parent=0 // pred_fallthru
    _
  // Predicated region
  $region26: #{anchor_occ_head_forward.1} parent=0 // pred_check
    _
  $region27: #{anchor_occ_head_forward.1} parent=0 // pred_check_branch
    %26 = sbr.rel (0) target = $region29
  $region28: #{anchor_occ_head_forward.1} parent=0 // pred_region
    _
  $region29: #{anchor_occ_head_forward.1} parent=0 // pred_fallthru
    _
  // Predicated region
  $region30: #{anchor_occ_head_forward.1} parent=0 // pred_check
    _
  $region31: #{anchor_occ_head_forward.1} parent=0 // pred_check_branch
    %28 = sbr.rel (0) target = $region33
  $region32: #{anchor_occ_head_forward.1} parent=0 // pred_region
    _
  $region33: #{anchor_occ_head_forward.1} parent=0 // pred_fallthru
    _
  %v29 = vld [vmem:[%s5] sm:$0xff]
  %v30 = vld [vmem:[%s5 + $0x8] sm:$0xff]
  %v31 = vld [vmem:[%s5 + $0x10] sm:$0xff]
  %v32 = vld [vmem:[%s5 + $0x18] sm:$0xff]
  %v33 = vld [vmem:[%s5 + $0x20] sm:$0xff]
  %v34 = vld [vmem:[%s5 + $0x28] sm:$0xff]
  %v35 = vld [vmem:[%s5 + $0x30] sm:$0xff]
  %v36 = vld [vmem:[%s5 + $0x38] sm:$0xff]
  %v37 = vld [vmem:[%s4] sm:$0xff]
  %v38 = vld [vmem:[%s4 + $0x8] sm:$0xff]
  %v39 = vld [vmem:[%s4 + $0x10] sm:$0xff]
  %v40 = vld [vmem:[%s4 + $0x18] sm:$0xff]
  %v41 = vld [vmem:[%s4 + $0x20] sm:$0xff]
  %v42 = vld [vmem:[%s4 + $0x28] sm:$0xff]
  %v43 = vld [vmem:[%s4 + $0x30] sm:$0xff]
  %v44 = vld [vmem:[%s4 + $0x38] sm:$0xff]
  %v45 = vadd.f32 %v29, %v37
  %v46 = vadd.f32 %v30, %v38
  %v47 = vadd.f32 %v31, %v39
  %v48 = vadd.f32 %v32, %v40
  %v49 = vadd.f32 %v33, %v41
  %v50 = vadd.f32 %v34, %v42
  %v51 = vadd.f32 %v35, %v43
  %v52 = vadd.f32 %v36, %v44
  %v53 = vld [vmem:[%s6] sm:$0xff]
  %v54 = vld [vmem:[%s6 + $0x8] sm:$0xff]
  %v55 = vld [vmem:[%s6 + $0x10] sm:$0xff]
  %v56 = vld [vmem:[%s6 + $0x18] sm:$0xff]
  %v57 = vld [vmem:[%s7] sm:$0xff]
  %v58 = vld [vmem:[%s7 + $0x8] sm:$0xff]
  %v59 = vld [vmem:[%s7 + $0x10] sm:$0xff]
  %v60 = vld [vmem:[%s7 + $0x18] sm:$0xff]
  %62 = vset.pattern.permute.xlu0 0
  %63 = vperm.xlu0 %62, %v57
  %v64 = vpop.permute.xlu0 %63
  %67 = vset.pattern.permute.xlu0 0
  %68 = vperm.xlu0 %67, %v58
  %v69 = vpop.permute.xlu0 %68
  %72 = vset.pattern.permute.xlu0 0
  %73 = vperm.xlu0 %72, %v59
  %v74 = vpop.permute.xlu0 %73
  %77 = vset.pattern.permute.xlu0 0
  %78 = vperm.xlu0 %77, %v60
  %v79 = vpop.permute.xlu0 %78
  %vm81 = vcmask 261120
  %v83 = vsel %vm81, %v53, 0
  %v86 = vsel %vm81, %v54, 0
  %v89 = vsel %vm81, %v55, 0
  %v92 = vsel %vm81, %v56, 0
  %94 = vmatprep.subr.mxu0 0.0
  %95 = vmatpush1.msra.mxu0 0.0
  %96 = vmatprep.subr.mxu0 0.0
  %97 = vmatpush1.msra.mxu0 0.0
  %98 = vmatprep.subr.mxu0 0.0
  %99 = vmatpush1.msra.mxu0 0.0
  %100 = vmatprep.subr.mxu0 0.0
  %101 = vmatpush1.msra.mxu0 0.0
  %102 = vmatprep.subr.mxu0 0.0
  %103 = vmatpush1.msra.mxu0 0.0
  %104 = vmatprep.subr.mxu0 0.0
  %105 = vmatpush1.msra.mxu0 0.0
  %106 = vmatprep.subr.mxu0 0.0
  %107 = vmatpush1.msra.mxu0 0.0
  %108 = vmatprep.subr.mxu0 0.0
  %109 = vmatpush1.msra.mxu0 0.0
  %110 = vmatprep.subr.mxu0 0.0
  %111 = vmatpush1.msra.mxu0 0.0
  %112 = vmatprep.subr.mxu0 0.0
  %113 = vmatpush1.msra.mxu0 0.0
  %114 = vmatprep.subr.mxu0 0.0
  %115 = vmatpush1.msra.mxu0 0.0
  %116 = vmatprep.subr.mxu0 0.0
  %117 = vmatpush1.msra.mxu0 0.0
  %118 = vmatprep.subr.mxu0 %v52
  %119 = vmatpush1.msra.mxu0 %v51
  %120 = vmatprep.subr.mxu0 %v50
  %121 = vmatpush1.msra.mxu0 %v49
  %122 = vmatprep.subr.mxu0 %v48
  %123 = vmatpush1.msra.mxu0 %v47
  %124 = vmatprep.subr.mxu0 %v46
  %125 = vmatpush1.msra.mxu0 %v45
  %126 = vmatprep.subr.mxu0 0.0
  %127 = vmatpush2.msra.mxu0 0.0
  %128 = vmatprep.subr.mxu0 0.0
  %129 = vmatpush2.msra.mxu0 0.0
  %130 = vmatprep.subr.mxu0 0.0
  %131 = vmatpush2.msra.mxu0 0.0
  %132 = vmatprep.subr.mxu0 0.0
  %133 = vmatpush2.msra.mxu0 0.0
  %134 = vmatprep.subr.mxu0 0.0
  %135 = vmatpush2.msra.mxu0 0.0
  %136 = vmatprep.subr.mxu0 0.0
  %137 = vmatpush2.msra.mxu0 0.0
  %138 = vmatprep.subr.mxu0 0.0
  %139 = vmatpush2.msra.mxu0 0.0
  %140 = vmatprep.subr.mxu0 0.0
  %141 = vmatpush2.msra.mxu0 0.0
  %142 = vmatprep.subr.mxu0 0.0
  %143 = vmatpush2.msra.mxu0 0.0
  %144 = vmatprep.subr.mxu0 0.0
  %145 = vmatpush2.msra.mxu0 0.0
  %146 = vmatprep.subr.mxu0 0.0
  %147 = vmatpush2.msra.mxu0 0.0
  %148 = vmatprep.subr.mxu0 0.0
  %149 = vmatpush2.msra.mxu0 0.0
  %150 = vmatprep.subr.mxu0 0.0
  %151 = vmatpush2.msra.mxu0 0.0
  %152 = vmatprep.subr.mxu0 0.0
  %153 = vmatpush2.msra.mxu0 0.0
  %154 = vmatprep.subr.mxu0 0.0
  %155 = vmatpush2.msra.mxu0 0.0
  %156 = vmatprep.subr.mxu0 0.0
  %157 = vmatpush2.msra.mxu0 0.0
  %158 = vmatprep.mubr.f32.mxu0 0.0
  %159 = vmatmul.mubr.f32.gmra.mxu0 %v83
  %v160 = vpop.f32.mrf.mxu0
  %v161 = vadd.f32 %v64, %v160
  %v162 = vpop.f32.mrf.mxu0
  %v163 = vadd.f32 %v64, %v162
  %164 = vmatprep.mubr.f32.mxu0 0.0
  %165 = vmatmul.mubr.f32.gmra.mxu0 %v86
  %v166 = vpop.f32.mrf.mxu0
  %v167 = vadd.f32 %v69, %v166
  %v168 = vpop.f32.mrf.mxu0
  %v169 = vadd.f32 %v69, %v168
  %170 = vmatprep.mubr.f32.mxu0 0.0
  %171 = vmatmul.mubr.f32.gmra.mxu0 %v89
  %v172 = vpop.f32.mrf.mxu0
  %v173 = vadd.f32 %v74, %v172
  %v174 = vpop.f32.mrf.mxu0
  %v175 = vadd.f32 %v74, %v174
  %176 = vmatprep.mubr.f32.mxu0 0.0
  %177 = vmatmul.mubr.f32.gmra.mxu0 %v92
  %v178 = vpop.f32.mrf.mxu0
  %v179 = vadd.f32 %v79, %v178
  %v180 = vpop.f32.mrf.mxu0
  %v181 = vadd.f32 %v79, %v180
  %182 = vdwg.mxu0
  %v183 = vld [vmem:[%s0] sm:$0x3]
  %vm184 = vcmp.gt.f32.partialorder %v183, 0.0
  %v185 = vsel %vm184, 1, 0
  %v186 = vlaneseq
  %v187 = vshrl.u32 %v186, 7
  %v188 = vsub.s32 0, %v187
  %v189 = vrot.slane %v185, %v188
  %v190 = vlaneseq
  %v191 = vshrl.u32 %v190, 7
  %v192 = vsub.s32 1, %v191
  %v193 = vrot.slane %v185, %v192
  %vm194 = vcmp.eq.s32.totalorder %v189, 1
  %vm195 = vcmp.eq.s32.totalorder %v193, 1
  %v196 = vsel %vm194, %v161, %v29
  %v197 = vsel %vm195, %v163, %v30
  %v198 = vsel %vm194, %v167, %v31
  %v199 = vsel %vm195, %v169, %v32
  %v200 = vsel %vm194, %v173, %v33
  %v201 = vsel %vm195, %v175, %v34
  %v202 = vsel %vm194, %v179, %v35
  %v203 = vsel %vm195, %v181, %v36
  %vm212 = vcmask 1042432
  %v213 = vrot.slane %v196, 5
  %v214 = vrot.slane %v197, 5
  %v215 = vrot.slane %v198, 5
  %v216 = vsel %vm212, %v213, %v215
  %v217 = vrot.slane %v199, 5
  %v218 = vsel %vm212, %v214, %v217
  %v219 = vrot.slane %v200, 5
  %v220 = vsel %vm212, %v215, %v219
  %v221 = vrot.slane %v201, 5
  %v222 = vsel %vm212, %v217, %v221
  %v223 = vrot.slane %v202, 5
  %v224 = vsel %vm212, %v219, %v223
  %v225 = vrot.slane %v203, 5
  %v226 = vsel %vm212, %v221, %v225
  %237 = vst [vmem:[%s8] sm:$0xf8] %v213
  %238 = vst [vmem:[%s8 + $0x8] sm:$0xf8] %v214
  %239 = vst [vmem:[%s8 + $0x10] sm:$0xff] %v216
  %240 = vst [vmem:[%s8 + $0x18] sm:$0xff] %v218
  %241 = vst [vmem:[%s8 + $0x20] sm:$0xff] %v220
  %242 = vst [vmem:[%s8 + $0x28] sm:$0xff] %v222
  %243 = vst [vmem:[%s8 + $0x30] sm:$0xff] %v224
  %244 = vst [vmem:[%s8 + $0x38] sm:$0xff] %v226
  %245 = vst [vmem:[%s8 + $0x40] sm:$0x7] %v223
  %246 = vst [vmem:[%s8 + $0x48] sm:$0x7] %v225
  %v247 = vld [vmem:[%s1] sm:$0x77]
  %v248 = vld [vmem:[%s2] sm:$0x7]
  %250 = vset.pattern.permute.xlu0 0
  %251 = vperm.xlu0 %250, %v248
  %v252 = vpop.permute.xlu0 %251
  %v254 = vunpack.c.l.s4 839922192
  %v255 = vunpack.c.0.s8 %v254
  %v256 = vlaneseq
  %v257 = vshrl.u32 %v256, 7
  %v258 = vsub.s32 %v255, %v257
  %v259 = vrot.slane %v252, %v258
  %v261 = vmul.f32 %v247, %v259
  %v262 = vld [vmem:[%s3] sm:$0x7]
  %264 = vset.pattern.permute.xlu0 0
  %265 = vperm.xlu0 %264, %v262
  %v266 = vpop.permute.xlu0 %265
  %v268 = vunpack.c.l.s4 839922192
  %v269 = vunpack.c.0.s8 %v268
  %v270 = vlaneseq
  %v271 = vshrl.u32 %v270, 7
  %v272 = vsub.s32 %v269, %v271
  %v273 = vrot.slane %v266, %v272
  %v275 = vadd.f32 %v261, %v273
  %v277 = vcombine.high %v275, %v275
  %279 = vst [vmem:[%s8] sm:$0x7] %v275
  %280 = vst [vmem:[%s8 + $0x8] sm:$0x7] %v277
  // Predicated region
  $region34: #{anchor_occ_head_forward.1} parent=0 // pred_check
    _
  $region35: #{anchor_occ_head_forward.1} parent=0 // pred_check_branch
    %282 = sbr.rel (0) target = $region37
  $region36: #{anchor_occ_head_forward.1} parent=0 // pred_region
    _
  $region37: #{anchor_occ_head_forward.1} parent=0 // pred_fallthru
    _
  // Predicated region
  $region38: #{anchor_occ_head_forward.1} parent=0 // pred_check
    _
  $region39: #{anchor_occ_head_forward.1} parent=0 // pred_check_branch
    %284 = sbr.rel (0) target = $region41
  $region40: #{anchor_occ_head_forward.1} parent=0 // pred_region
    _
  $region41: #{anchor_occ_head_forward.1} parent=0 // pred_fallthru
    _

</llo_original>
